<compile_context>
chip_gen: v7x
topology: tpu7x:2x2x1
jax: 0.10.0
libtpu: 0.0.40
codegen_flags: <defaults>
</compile_context>

<pallas_src>
import math
import functools

import numpy as np
import jax
import jax.numpy as jnp
from jax import lax
from jax.experimental import pallas as pl
from jax.experimental.pallas import tpu as pltpu

EPS = 1e-5  # nn.LayerNorm default


def encoder_layer_kernel(x_ref, hsel_ref,
                         g1_ref, be1_ref,
                         wqkv_ref, bqkv_ref,
                         wo_ref, bo_ref,
                         g2_ref, be2_ref,
                         w1_ref, b1_ref,
                         w2_ref, b2_ref,
                         o_ref,
                         *, num_heads, head_dim):
    f32 = jnp.float32
    cdt = wqkv_ref.dtype                       # compute dtype for MXU matmuls
    E = num_heads * head_dim

    x = x_ref[...].astype(f32)                 # (N, E)

    # ---- LayerNorm 1 (f32) ----
    mu = jnp.mean(x, axis=-1, keepdims=True)
    var = jnp.mean(jnp.square(x - mu), axis=-1, keepdims=True)
    h = (x - mu) * lax.rsqrt(var + EPS) * g1_ref[...] + be1_ref[...]

    # ---- qkv projection (MXU, cdt operands, f32 accumulation) ----
    qkv = jnp.dot(h.astype(cdt), wqkv_ref[...],
                  preferred_element_type=f32) + bqkv_ref[...]          # (N, 3E) f32

    # ---- attention (algebraically simplified) ----
    # softmax rows sum to 1 => each head's output is the column-sum of its V block,
    # broadcast over queries; the PyTorch raw reshape then scrambles heads across
    # rows according to the static head_sel map (built in the wrapper).
    v_colsum = jnp.sum(qkv[:, 2 * E:3 * E], axis=0, keepdims=True)     # (1, E)
    head_sel = hsel_ref[...]                                           # (N, E) int32

    pre_fc = jnp.zeros_like(x)                                         # (N, E) f32
    for hd in range(num_heads):
        blk = v_colsum[:, hd * head_dim:(hd + 1) * head_dim]           # (1, D)
        row = jnp.concatenate([blk] * num_heads, axis=1)               # (1, E), head hd tiled
        pre_fc = pre_fc + jnp.where(head_sel == hd, row, 0.0)

    attn_out = jnp.dot(pre_fc.astype(cdt), wo_ref[...],
                       preferred_element_type=f32) + bo_ref[...]       # (N, E)

    x2 = x + attn_out                                                  # residual 1 (f32)

    # ---- LayerNorm 2 + MLP ----
    mu2 = jnp.mean(x2, axis=-1, keepdims=True)
    var2 = jnp.mean(jnp.square(x2 - mu2), axis=-1, keepdims=True)
    h2 = (x2 - mu2) * lax.rsqrt(var2 + EPS) * g2_ref[...] + be2_ref[...]

    z = jnp.dot(h2.astype(cdt), w1_ref[...],
                preferred_element_type=f32) + b1_ref[...]              # (N, M)
    z = 0.5 * z * (1.0 + lax.erf(z * (1.0 / math.sqrt(2.0))))          # exact GELU, f32 (EUP)
    y = jnp.dot(z.astype(cdt), w2_ref[...],
                preferred_element_type=f32) + b2_ref[...]              # (N, E)

    o_ref[...] = (x2 + y).astype(o_ref.dtype)                          # residual 2


def transformer_encoder_layer(x, params, *, num_heads, compute_dtype=jnp.bfloat16):
    B, N, E = x.shape
    assert E % num_heads == 0
    head_dim = E // num_heads
    M = params["w1"].shape[1]

    # Weights of the big matmuls in compute_dtype (bf16: 2x MXU throughput on
    # v6e/v7x and half the VMEM); accumulation stays f32 in the kernel.
    wqkv = params["wqkv"].astype(compute_dtype)
    wo = params["wo"].astype(compute_dtype)
    w1 = params["w1"].astype(compute_dtype)
    w2 = params["w2"].astype(compute_dtype)

    # Static map reproducing the PyTorch (B,H,N,D) -> (B,N,E) raw reshape:
    # output column c of row r reads head (r*H + c//D) // N.
    r = np.arange(N, dtype=np.int64)[:, None]
    c = np.arange(E, dtype=np.int64)[None, :]
    head_sel = jnp.asarray(((r * num_heads + c // head_dim) // N).astype(np.int32))

    def full_spec(arr):
        nd = arr.ndim
        return pl.BlockSpec(arr.shape, lambda b: (0,) * nd)   # grid-invariant block

    # VMEM budget: double-buffered x/out/head_sel tiles + resident weights/biases
    # + f32 intermediates, with headroom; clamped to [32 MiB, 48 MiB].
    witem = jnp.dtype(compute_dtype).itemsize
    weight_bytes = (wqkv.size + wo.size + w1.size + w2.size) * witem
    bias_bytes = 4 * (3 * E + 6 * E + M)
    act_bytes = N * E * 4
    inter_bytes = N * (3 * E + M + 6 * E) * 4
    est = 2 * (3 * act_bytes) + 2 * (weight_bytes + bias_bytes) + inter_bytes
    vmem_limit = int(min(max(2 * est, 32 * 1024 * 1024), 48 * 1024 * 1024))

    kernel = functools.partial(encoder_layer_kernel,
                               num_heads=num_heads, head_dim=head_dim)

    return pl.pallas_call(
        kernel,
        out_shape=jax.ShapeDtypeStruct((B, N, E), jnp.float32),
        grid_spec=pltpu.PrefetchScalarGridSpec(
            num_scalar_prefetch=0,
            grid=(B,),
            in_specs=[
                pl.BlockSpec((None, N, E), lambda b: (b, 0, 0)),   # x (batch squeezed)
                full_spec(head_sel),                               # static head map
                full_spec(params["g1"]), full_spec(params["be1"]),
                full_spec(wqkv), full_spec(params["bqkv"]),
                full_spec(wo), full_spec(params["bo"]),
                full_spec(params["g2"]), full_spec(params["be2"]),
                full_spec(w1), full_spec(params["b1"]),
                full_spec(w2), full_spec(params["b2"]),
            ],
            out_specs=pl.BlockSpec((None, N, E), lambda b: (b, 0, 0)),
        ),
        compiler_params=pltpu.CompilerParams(
            dimension_semantics=("parallel",),
            vmem_limit_bytes=vmem_limit,
        ),
    )(x, head_sel,
      params["g1"], params["be1"],
      wqkv, params["bqkv"],
      wo, params["bo"],
      params["g2"], params["be2"],
      w1, params["b1"],
      w2, params["b2"])


# ---------------- pure-JAX reference (faithful to the PyTorch module) ----------------
def reference(x, p, *, num_heads):
    B, N, E = x.shape
    D = E // num_heads

    def ln(v, g, b):
        mu = jnp.mean(v, -1, keepdims=True)
        var = jnp.mean((v - mu) ** 2, -1, keepdims=True)
        return (v - mu) / jnp.sqrt(var + EPS) * g + b

    h = ln(x, p["g1"], p["be1"])
    qkv = h @ p["wqkv"] + p["bqkv"]                                   # (B,N,3E)
    qkv = qkv.reshape(B, N, 3, num_heads, D).transpose(2, 0, 3, 1, 4)  # (3,B,H,N,D)
    q, k, v = qkv[0], qkv[1], qkv[2]
    energy = jnp.einsum('bnqd,bnkd->bnqk', q, k)
    attn = jax.nn.softmax(energy / math.sqrt(D), axis=-1)
    out = jnp.einsum('bnqk,bnvd->bnqd', attn, v)                      # (B,H,N,D)
    out = out.reshape(B, N, E)        # faithful: raw reshape, no permute (as in torch)
    out = out @ p["wo"] + p["bo"]
    x2 = x + out
    h2 = ln(x2, p["g2"], p["be2"])
    z = h2 @ p["w1"] + p["b1"]
    z = 0.5 * z * (1.0 + lax.erf(z / math.sqrt(2.0)))
    y = z @ p["w2"] + p["b2"]
    return x2 + y


if __name__ == "__main__":
    B, N, E = 2, 8, 32
    num_heads, M = 4, 64

    key = jax.random.PRNGKey(0)
    ks = jax.random.split(key, 12)

    def init(k, shape, scale=0.1):
        return (scale * jax.random.normal(k, shape)).astype(jnp.float32)

    params = {
        "g1":   jnp.ones((1, E), jnp.float32),
        "be1":  jnp.zeros((1, E), jnp.float32),
        "wqkv": init(ks[0], (E, 3 * E)),
        "bqkv": init(ks[1], (1, 3 * E)),
        "wo":   init(ks[2], (E, E)),
        "bo":   init(ks[3], (1, E)),
        "g2":   jnp.ones((1, E), jnp.float32),
        "be2":  jnp.zeros((1, E), jnp.float32),
        "w1":   init(ks[4], (E, M)),
        "b1":   init(ks[5], (1, M)),
        "w2":   init(ks[6], (M, E)),
        "b2":   init(ks[7], (1, E)),
    }

    x = init(ks[8], (B, N, E), scale=1.0)

    with jax.default_matmul_precision("highest"):
        ref = jax.block_until_ready(reference(x, params, num_heads=num_heads))

    # f32 compute path: tight check against the faithful reference.
    out_f32 = transformer_encoder_layer(x, params, num_heads=num_heads,
                                        compute_dtype=jnp.float32)
    out_f32 = jax.block_until_ready(out_f32)
    assert out_f32.shape == (B, N, E)
    err32 = float(jnp.max(jnp.abs(out_f32 - ref)))
    assert err32 < 1e-3, f"f32 max abs err = {err32}"

    # bf16 compute path (production setting: bf16 operands, f32 accumulation).
    out_bf16 = transformer_encoder_layer(x, params, num_heads=num_heads,
                                         compute_dtype=jnp.bfloat16)
    out_bf16 = jax.block_until_ready(out_bf16)
    errbf = float(jnp.max(jnp.abs(out_bf16 - ref)))
    assert errbf < 8e-2, f"bf16 max abs err = {errbf}"

    print("KERNEL_OK")
</pallas_src>

<mosaic_0001>
module attributes {stable_mosaic.version = 11 : i64} {
  func.func @encoder_layer_kernel(%arg0: i32, %arg1: memref<1x8x32xf32, #tpu.memory_space<vmem>>, %arg2: memref<8x32xi32, #tpu.memory_space<vmem>>, %arg3: memref<1x32xf32, #tpu.memory_space<vmem>>, %arg4: memref<1x32xf32, #tpu.memory_space<vmem>>, %arg5: memref<32x96xf32, #tpu.memory_space<vmem>>, %arg6: memref<1x96xf32, #tpu.memory_space<vmem>>, %arg7: memref<32x32xf32, #tpu.memory_space<vmem>>, %arg8: memref<1x32xf32, #tpu.memory_space<vmem>>, %arg9: memref<1x32xf32, #tpu.memory_space<vmem>>, %arg10: memref<1x32xf32, #tpu.memory_space<vmem>>, %arg11: memref<32x64xf32, #tpu.memory_space<vmem>>, %arg12: memref<1x64xf32, #tpu.memory_space<vmem>>, %arg13: memref<64x32xf32, #tpu.memory_space<vmem>>, %arg14: memref<1x32xf32, #tpu.memory_space<vmem>>, %arg15: memref<1x8x32xf32, #tpu.memory_space<vmem>>) attributes {dimension_semantics = [#tpu.dimension_semantics<parallel>], iteration_bounds = array<i64: 2>, scalar_prefetch = 0 : i64, scratch_operands = 0 : i64, tpu.core_type = #tpu.core_type<tc>, window_params = [{transform_indices = @transform_0, window_bounds = array<i64: 1, 8, 32>}, {pipeline_mode = #tpu.pipeline_mode<synchronous>, transform_indices = @transform_1, window_bounds = array<i64: 8, 32>}, {pipeline_mode = #tpu.pipeline_mode<synchronous>, transform_indices = @transform_2, window_bounds = array<i64: 1, 32>}, {pipeline_mode = #tpu.pipeline_mode<synchronous>, transform_indices = @transform_3, window_bounds = array<i64: 1, 32>}, {pipeline_mode = #tpu.pipeline_mode<synchronous>, transform_indices = @transform_4, window_bounds = array<i64: 32, 96>}, {pipeline_mode = #tpu.pipeline_mode<synchronous>, transform_indices = @transform_5, window_bounds = array<i64: 1, 96>}, {pipeline_mode = #tpu.pipeline_mode<synchronous>, transform_indices = @transform_6, window_bounds = array<i64: 32, 32>}, {pipeline_mode = #tpu.pipeline_mode<synchronous>, transform_indices = @transform_7, window_bounds = array<i64: 1, 32>}, {pipeline_mode = #tpu.pipeline_mode<synchronous>, transform_indices = @transform_8, window_bounds = array<i64: 1, 32>}, {pipeline_mode = #tpu.pipeline_mode<synchronous>, transform_indices = @transform_9, window_bounds = array<i64: 1, 32>}, {pipeline_mode = #tpu.pipeline_mode<synchronous>, transform_indices = @transform_10, window_bounds = array<i64: 32, 64>}, {pipeline_mode = #tpu.pipeline_mode<synchronous>, transform_indices = @transform_11, window_bounds = array<i64: 1, 64>}, {pipeline_mode = #tpu.pipeline_mode<synchronous>, transform_indices = @transform_12, window_bounds = array<i64: 64, 32>}, {pipeline_mode = #tpu.pipeline_mode<synchronous>, transform_indices = @transform_13, window_bounds = array<i64: 1, 32>}, {transform_indices = @transform_14, window_bounds = array<i64: 1, 8, 32>}]} {
    %c0 = arith.constant 0 : index
    %c0_0 = arith.constant 0 : index
    %c0_1 = arith.constant 0 : index
    %0 = vector.load %arg1[%c0, %c0_0, %c0_1] : memref<1x8x32xf32, #tpu.memory_space<vmem>>, vector<1x8x32xf32>
    %1 = vector.shape_cast %0 : vector<1x8x32xf32> to vector<8x32xf32>
    %cst = arith.constant dense<0.000000e+00> : vector<8xf32>
    %2 = vector.multi_reduction <add>, %1, %cst [1] : vector<8x32xf32> to vector<8xf32>
    %3 = vector.shape_cast %2 : vector<8xf32> to vector<8x1xf32>
    %cst_2 = arith.constant 3.200000e+01 : f32
    %4 = vector.broadcast %cst_2 : f32 to vector<8x1xf32>
    %5 = arith.divf %3, %4 : vector<8x1xf32>
    %6 = vector.broadcast %5 : vector<8x1xf32> to vector<8x32xf32>
    %7 = arith.subf %1, %6 : vector<8x32xf32>
    %8 = arith.mulf %7, %7 : vector<8x32xf32>
    %cst_3 = arith.constant dense<0.000000e+00> : vector<8xf32>
    %9 = vector.multi_reduction <add>, %8, %cst_3 [1] : vector<8x32xf32> to vector<8xf32>
    %10 = vector.shape_cast %9 : vector<8xf32> to vector<8x1xf32>
    %cst_4 = arith.constant 3.200000e+01 : f32
    %11 = vector.broadcast %cst_4 : f32 to vector<8x1xf32>
    %12 = arith.divf %10, %11 : vector<8x1xf32>
    %13 = vector.broadcast %5 : vector<8x1xf32> to vector<8x32xf32>
    %14 = arith.subf %1, %13 : vector<8x32xf32>
    %cst_5 = arith.constant 9.99999974E-6 : f32
    %15 = vector.broadcast %cst_5 : f32 to vector<8x1xf32>
    %16 = arith.addf %12, %15 : vector<8x1xf32>
    %17 = math.rsqrt %16 : vector<8x1xf32>
    %18 = vector.broadcast %17 : vector<8x1xf32> to vector<8x32xf32>
    %19 = arith.mulf %14, %18 : vector<8x32xf32>
    %c0_6 = arith.constant 0 : index
    %c0_7 = arith.constant 0 : index
    %20 = vector.load %arg3[%c0_6, %c0_7] : memref<1x32xf32, #tpu.memory_space<vmem>>, vector<1x32xf32>
    %21 = vector.broadcast %20 : vector<1x32xf32> to vector<8x32xf32>
    %22 = arith.mulf %19, %21 : vector<8x32xf32>
    %c0_8 = arith.constant 0 : index
    %c0_9 = arith.constant 0 : index
    %23 = vector.load %arg4[%c0_8, %c0_9] : memref<1x32xf32, #tpu.memory_space<vmem>>, vector<1x32xf32>
    %24 = vector.broadcast %23 : vector<1x32xf32> to vector<8x32xf32>
    %25 = arith.addf %22, %24 : vector<8x32xf32>
    %c0_10 = arith.constant 0 : index
    %c0_11 = arith.constant 0 : index
    %26 = vector.load %arg5[%c0_10, %c0_11] : memref<32x96xf32, #tpu.memory_space<vmem>>, vector<32x96xf32>
    %cst_12 = arith.constant dense<0.000000e+00> : vector<8x96xf32>
    %27 = tpu.matmul %25, %26, %cst_12 {dimension_numbers = #tpu.dot_dimension_numbers<[1], [0], [0], [1], [0, 0, 1, 1], [], []>} : vector<8x32xf32>, vector<32x96xf32>, vector<8x96xf32> -> vector<8x96xf32>
    %c0_13 = arith.constant 0 : index
    %c0_14 = arith.constant 0 : index
    %28 = vector.load %arg6[%c0_13, %c0_14] : memref<1x96xf32, #tpu.memory_space<vmem>>, vector<1x96xf32>
    %29 = vector.broadcast %28 : vector<1x96xf32> to vector<8x96xf32>
    %30 = arith.addf %27, %29 : vector<8x96xf32>
    %31 = vector.extract_strided_slice %30 {offsets = [0, 64], sizes = [8, 32], strides = [1, 1]} : vector<8x96xf32> to vector<8x32xf32>
    %cst_15 = arith.constant dense<0.000000e+00> : vector<32xf32>
    %32 = vector.multi_reduction <add>, %31, %cst_15 [0] : vector<8x32xf32> to vector<32xf32>
    %33 = vector.shape_cast %32 : vector<32xf32> to vector<1x32xf32>
    %c0_16 = arith.constant 0 : index
    %c0_17 = arith.constant 0 : index
    %34 = vector.load %arg2[%c0_16, %c0_17] : memref<8x32xi32, #tpu.memory_space<vmem>>, vector<8x32xi32>
    %cst_18 = arith.constant 0.000000e+00 : f32
    %35 = vector.broadcast %cst_18 : f32 to vector<8x32xf32>
    %36 = vector.extract_strided_slice %33 {offsets = [0, 0], sizes = [1, 8], strides = [1, 1]} : vector<1x32xf32> to vector<1x8xf32>
    %37 = tpu.concatenate %36, %36, %36, %36 in 1 : vector<1x8xf32>, vector<1x8xf32>, vector<1x8xf32>, vector<1x8xf32> -> vector<1x32xf32>
    %c0_i32 = arith.constant 0 : i32
    %38 = vector.broadcast %c0_i32 : i32 to vector<8x32xi32>
    %39 = arith.cmpi eq, %34, %38 : vector<8x32xi32>
    %cst_19 = arith.constant 0.000000e+00 : f32
    %40 = vector.shape_cast %37 : vector<1x32xf32> to vector<1x32xf32>
    %41 = vector.broadcast %40 : vector<1x32xf32> to vector<8x32xf32>
    %42 = vector.broadcast %cst_19 : f32 to vector<8x32xf32>
    %43 = arith.select %39, %41, %42 : vector<8x32xi1>, vector<8x32xf32>
    %44 = arith.addf %35, %43 : vector<8x32xf32>
    %45 = vector.extract_strided_slice %33 {offsets = [0, 8], sizes = [1, 8], strides = [1, 1]} : vector<1x32xf32> to vector<1x8xf32>
    %46 = tpu.concatenate %45, %45, %45, %45 in 1 : vector<1x8xf32>, vector<1x8xf32>, vector<1x8xf32>, vector<1x8xf32> -> vector<1x32xf32>
    %c1_i32 = arith.constant 1 : i32
    %47 = vector.broadcast %c1_i32 : i32 to vector<8x32xi32>
    %48 = arith.cmpi eq, %34, %47 : vector<8x32xi32>
    %cst_20 = arith.constant 0.000000e+00 : f32
    %49 = vector.shape_cast %46 : vector<1x32xf32> to vector<1x32xf32>
    %50 = vector.broadcast %49 : vector<1x32xf32> to vector<8x32xf32>
    %51 = vector.broadcast %cst_20 : f32 to vector<8x32xf32>
    %52 = arith.select %48, %50, %51 : vector<8x32xi1>, vector<8x32xf32>
    %53 = arith.addf %44, %52 : vector<8x32xf32>
    %54 = vector.extract_strided_slice %33 {offsets = [0, 16], sizes = [1, 8], strides = [1, 1]} : vector<1x32xf32> to vector<1x8xf32>
    %55 = tpu.concatenate %54, %54, %54, %54 in 1 : vector<1x8xf32>, vector<1x8xf32>, vector<1x8xf32>, vector<1x8xf32> -> vector<1x32xf32>
    %c2_i32 = arith.constant 2 : i32
    %56 = vector.broadcast %c2_i32 : i32 to vector<8x32xi32>
    %57 = arith.cmpi eq, %34, %56 : vector<8x32xi32>
    %cst_21 = arith.constant 0.000000e+00 : f32
    %58 = vector.shape_cast %55 : vector<1x32xf32> to vector<1x32xf32>
    %59 = vector.broadcast %58 : vector<1x32xf32> to vector<8x32xf32>
    %60 = vector.broadcast %cst_21 : f32 to vector<8x32xf32>
    %61 = arith.select %57, %59, %60 : vector<8x32xi1>, vector<8x32xf32>
    %62 = arith.addf %53, %61 : vector<8x32xf32>
    %63 = vector.extract_strided_slice %33 {offsets = [0, 24], sizes = [1, 8], strides = [1, 1]} : vector<1x32xf32> to vector<1x8xf32>
    %64 = tpu.concatenate %63, %63, %63, %63 in 1 : vector<1x8xf32>, vector<1x8xf32>, vector<1x8xf32>, vector<1x8xf32> -> vector<1x32xf32>
    %c3_i32 = arith.constant 3 : i32
    %65 = vector.broadcast %c3_i32 : i32 to vector<8x32xi32>
    %66 = arith.cmpi eq, %34, %65 : vector<8x32xi32>
    %cst_22 = arith.constant 0.000000e+00 : f32
    %67 = vector.shape_cast %64 : vector<1x32xf32> to vector<1x32xf32>
    %68 = vector.broadcast %67 : vector<1x32xf32> to vector<8x32xf32>
    %69 = vector.broadcast %cst_22 : f32 to vector<8x32xf32>
    %70 = arith.select %66, %68, %69 : vector<8x32xi1>, vector<8x32xf32>
    %71 = arith.addf %62, %70 : vector<8x32xf32>
    %c0_23 = arith.constant 0 : index
    %c0_24 = arith.constant 0 : index
    %72 = vector.load %arg7[%c0_23, %c0_24] : memref<32x32xf32, #tpu.memory_space<vmem>>, vector<32x32xf32>
    %cst_25 = arith.constant dense<0.000000e+00> : vector<8x32xf32>
    %73 = tpu.matmul %71, %72, %cst_25 {dimension_numbers = #tpu.dot_dimension_numbers<[1], [0], [0], [1], [0, 0, 1, 1], [], []>} : vector<8x32xf32>, vector<32x32xf32>, vector<8x32xf32> -> vector<8x32xf32>
    %c0_26 = arith.constant 0 : index
    %c0_27 = arith.constant 0 : index
    %74 = vector.load %arg8[%c0_26, %c0_27] : memref<1x32xf32, #tpu.memory_space<vmem>>, vector<1x32xf32>
    %75 = vector.broadcast %74 : vector<1x32xf32> to vector<8x32xf32>
    %76 = arith.addf %73, %75 : vector<8x32xf32>
    %77 = arith.addf %1, %76 : vector<8x32xf32>
    %cst_28 = arith.constant dense<0.000000e+00> : vector<8xf32>
    %78 = vector.multi_reduction <add>, %77, %cst_28 [1] : vector<8x32xf32> to vector<8xf32>
    %79 = vector.shape_cast %78 : vector<8xf32> to vector<8x1xf32>
    %cst_29 = arith.constant 3.200000e+01 : f32
    %80 = vector.broadcast %cst_29 : f32 to vector<8x1xf32>
    %81 = arith.divf %79, %80 : vector<8x1xf32>
    %82 = vector.broadcast %81 : vector<8x1xf32> to vector<8x32xf32>
    %83 = arith.subf %77, %82 : vector<8x32xf32>
    %84 = arith.mulf %83, %83 : vector<8x32xf32>
    %cst_30 = arith.constant dense<0.000000e+00> : vector<8xf32>
    %85 = vector.multi_reduction <add>, %84, %cst_30 [1] : vector<8x32xf32> to vector<8xf32>
    %86 = vector.shape_cast %85 : vector<8xf32> to vector<8x1xf32>
    %cst_31 = arith.constant 3.200000e+01 : f32
    %87 = vector.broadcast %cst_31 : f32 to vector<8x1xf32>
    %88 = arith.divf %86, %87 : vector<8x1xf32>
    %89 = vector.broadcast %81 : vector<8x1xf32> to vector<8x32xf32>
    %90 = arith.subf %77, %89 : vector<8x32xf32>
    %cst_32 = arith.constant 9.99999974E-6 : f32
    %91 = vector.broadcast %cst_32 : f32 to vector<8x1xf32>
    %92 = arith.addf %88, %91 : vector<8x1xf32>
    %93 = math.rsqrt %92 : vector<8x1xf32>
    %94 = vector.broadcast %93 : vector<8x1xf32> to vector<8x32xf32>
    %95 = arith.mulf %90, %94 : vector<8x32xf32>
    %c0_33 = arith.constant 0 : index
    %c0_34 = arith.constant 0 : index
    %96 = vector.load %arg9[%c0_33, %c0_34] : memref<1x32xf32, #tpu.memory_space<vmem>>, vector<1x32xf32>
    %97 = vector.broadcast %96 : vector<1x32xf32> to vector<8x32xf32>
    %98 = arith.mulf %95, %97 : vector<8x32xf32>
    %c0_35 = arith.constant 0 : index
    %c0_36 = arith.constant 0 : index
    %99 = vector.load %arg10[%c0_35, %c0_36] : memref<1x32xf32, #tpu.memory_space<vmem>>, vector<1x32xf32>
    %100 = vector.broadcast %99 : vector<1x32xf32> to vector<8x32xf32>
    %101 = arith.addf %98, %100 : vector<8x32xf32>
    %c0_37 = arith.constant 0 : index
    %c0_38 = arith.constant 0 : index
    %102 = vector.load %arg11[%c0_37, %c0_38] : memref<32x64xf32, #tpu.memory_space<vmem>>, vector<32x64xf32>
    %cst_39 = arith.constant dense<0.000000e+00> : vector<8x64xf32>
    %103 = tpu.matmul %101, %102, %cst_39 {dimension_numbers = #tpu.dot_dimension_numbers<[1], [0], [0], [1], [0, 0, 1, 1], [], []>} : vector<8x32xf32>, vector<32x64xf32>, vector<8x64xf32> -> vector<8x64xf32>
    %c0_40 = arith.constant 0 : index
    %c0_41 = arith.constant 0 : index
    %104 = vector.load %arg12[%c0_40, %c0_41] : memref<1x64xf32, #tpu.memory_space<vmem>>, vector<1x64xf32>
    %105 = vector.broadcast %104 : vector<1x64xf32> to vector<8x64xf32>
    %106 = arith.addf %103, %105 : vector<8x64xf32>
    %cst_42 = arith.constant 5.000000e-01 : f32
    %107 = vector.broadcast %cst_42 : f32 to vector<8x64xf32>
    %108 = arith.mulf %107, %106 : vector<8x64xf32>
    %cst_43 = arith.constant 0.707106769 : f32
    %109 = vector.broadcast %cst_43 : f32 to vector<8x64xf32>
    %110 = arith.mulf %106, %109 : vector<8x64xf32>
    %111 = math.erf %110 : vector<8x64xf32>
    %cst_44 = arith.constant 1.000000e+00 : f32
    %112 = vector.broadcast %cst_44 : f32 to vector<8x64xf32>
    %113 = arith.addf %112, %111 : vector<8x64xf32>
    %114 = arith.mulf %108, %113 : vector<8x64xf32>
    %c0_45 = arith.constant 0 : index
    %c0_46 = arith.constant 0 : index
    %115 = vector.load %arg13[%c0_45, %c0_46] : memref<64x32xf32, #tpu.memory_space<vmem>>, vector<64x32xf32>
    %cst_47 = arith.constant dense<0.000000e+00> : vector<8x32xf32>
    %116 = tpu.matmul %114, %115, %cst_47 {dimension_numbers = #tpu.dot_dimension_numbers<[1], [0], [0], [1], [0, 0, 1, 1], [], []>} : vector<8x64xf32>, vector<64x32xf32>, vector<8x32xf32> -> vector<8x32xf32>
    %c0_48 = arith.constant 0 : index
    %c0_49 = arith.constant 0 : index
    %117 = vector.load %arg14[%c0_48, %c0_49] : memref<1x32xf32, #tpu.memory_space<vmem>>, vector<1x32xf32>
    %118 = vector.broadcast %117 : vector<1x32xf32> to vector<8x32xf32>
    %119 = arith.addf %116, %118 : vector<8x32xf32>
    %120 = arith.addf %77, %119 : vector<8x32xf32>
    %c0_50 = arith.constant 0 : index
    %c0_51 = arith.constant 0 : index
    %c0_52 = arith.constant 0 : index
    %121 = vector.load %arg15[%c0_50, %c0_51, %c0_52] : memref<1x8x32xf32, #tpu.memory_space<vmem>>, vector<1x8x32xf32>
    %122 = vector.shape_cast %121 : vector<1x8x32xf32> to vector<8x32xf32>
    %123 = vector.shape_cast %120 : vector<8x32xf32> to vector<1x8x32xf32>
    tpu.vector_store %arg15[%c0_50, %c0_51, %c0_52], %123 {strides = array<i32>} : memref<1x8x32xf32, #tpu.memory_space<vmem>>, vector<1x8x32xf32>,
    return
  }
  func.func @transform_0(%arg0: i32) -> (i32, i32, i32) {
    %c0_i32 = arith.constant 0 : i32
    %c0_i32_0 = arith.constant 0 : i32
    %c0_i32_1 = arith.constant 0 : i32
    return %arg0, %c0_i32, %c0_i32_0 : i32, i32, i32
  }
  func.func @transform_1(%arg0: i32) -> (i32, i32) {
    %c0_i32 = arith.constant 0 : i32
    %c0_i32_0 = arith.constant 0 : i32
    %c0_i32_1 = arith.constant 0 : i32
    return %c0_i32, %c0_i32_0 : i32, i32
  }
  func.func @transform_2(%arg0: i32) -> (i32, i32) {
    %c0_i32 = arith.constant 0 : i32
    %c0_i32_0 = arith.constant 0 : i32
    %c0_i32_1 = arith.constant 0 : i32
    return %c0_i32, %c0_i32_0 : i32, i32
  }
  func.func @transform_3(%arg0: i32) -> (i32, i32) {
    %c0_i32 = arith.constant 0 : i32
    %c0_i32_0 = arith.constant 0 : i32
    %c0_i32_1 = arith.constant 0 : i32
    return %c0_i32, %c0_i32_0 : i32, i32
  }
  func.func @transform_4(%arg0: i32) -> (i32, i32) {
    %c0_i32 = arith.constant 0 : i32
    %c0_i32_0 = arith.constant 0 : i32
    %c0_i32_1 = arith.constant 0 : i32
    return %c0_i32, %c0_i32_0 : i32, i32
  }
  func.func @transform_5(%arg0: i32) -> (i32, i32) {
    %c0_i32 = arith.constant 0 : i32
    %c0_i32_0 = arith.constant 0 : i32
    %c0_i32_1 = arith.constant 0 : i32
    return %c0_i32, %c0_i32_0 : i32, i32
  }
  func.func @transform_6(%arg0: i32) -> (i32, i32) {
    %c0_i32 = arith.constant 0 : i32
    %c0_i32_0 = arith.constant 0 : i32
    %c0_i32_1 = arith.constant 0 : i32
    return %c0_i32, %c0_i32_0 : i32, i32
  }
  func.func @transform_7(%arg0: i32) -> (i32, i32) {
    %c0_i32 = arith.constant 0 : i32
    %c0_i32_0 = arith.constant 0 : i32
    %c0_i32_1 = arith.constant 0 : i32
    return %c0_i32, %c0_i32_0 : i32, i32
  }
  func.func @transform_8(%arg0: i32) -> (i32, i32) {
    %c0_i32 = arith.constant 0 : i32
    %c0_i32_0 = arith.constant 0 : i32
    %c0_i32_1 = arith.constant 0 : i32
    return %c0_i32, %c0_i32_0 : i32, i32
  }
  func.func @transform_9(%arg0: i32) -> (i32, i32) {
    %c0_i32 = arith.constant 0 : i32
    %c0_i32_0 = arith.constant 0 : i32
    %c0_i32_1 = arith.constant 0 : i32
    return %c0_i32, %c0_i32_0 : i32, i32
  }
  func.func @transform_10(%arg0: i32) -> (i32, i32) {
    %c0_i32 = arith.constant 0 : i32
    %c0_i32_0 = arith.constant 0 : i32
    %c0_i32_1 = arith.constant 0 : i32
    return %c0_i32, %c0_i32_0 : i32, i32
  }
  func.func @transform_11(%arg0: i32) -> (i32, i32) {
    %c0_i32 = arith.constant 0 : i32
    %c0_i32_0 = arith.constant 0 : i32
    %c0_i32_1 = arith.constant 0 : i32
    return %c0_i32, %c0_i32_0 : i32, i32
  }
  func.func @transform_12(%arg0: i32) -> (i32, i32) {
    %c0_i32 = arith.constant 0 : i32
    %c0_i32_0 = arith.constant 0 : i32
    %c0_i32_1 = arith.constant 0 : i32
    return %c0_i32, %c0_i32_0 : i32, i32
  }
  func.func @transform_13(%arg0: i32) -> (i32, i32) {
    %c0_i32 = arith.constant 0 : i32
    %c0_i32_0 = arith.constant 0 : i32
    %c0_i32_1 = arith.constant 0 : i32
    return %c0_i32, %c0_i32_0 : i32, i32
  }
  func.func @transform_14(%arg0: i32) -> (i32, i32, i32) {
    %c0_i32 = arith.constant 0 : i32
    %c0_i32_0 = arith.constant 0 : i32
    %c0_i32_1 = arith.constant 0 : i32
    return %arg0, %c0_i32, %c0_i32_0 : i32, i32, i32
  }
}

</mosaic_0001>

<llo_original>
// kernel: tpu_custom_call.1
$region0: #{tpu_custom_call.1}
  #allocation0 [shape = 'u32[]', space=smem, size = 0x4, offset = 0x4, fixed_abs, tag = 'smem constant byte address 0x4 - core index']
  #allocation1 [shape = 'u32[144,128]{1,0:T(1,128)}', space=vmem, size = 0x12000, scoped, tag = 'internal scratch']
  %s0 = inlined_call_operand.hbm [shape: f32[2,8,32], index: 0, kind: input, shape index: {}]
  %s1 = inlined_call_operand.hbm [shape: s32[8,32], index: 1, kind: input, shape index: {}]
  %s2 = inlined_call_operand.vmem [shape: f32[1,32], index: 2, kind: input, shape index: {}]
  %s3 = inlined_call_operand.vmem [shape: f32[1,32], index: 3, kind: input, shape index: {}]
  %s4 = inlined_call_operand.vmem [shape: f32[32,96], index: 4, kind: input, shape index: {}]
  %s5 = inlined_call_operand.vmem [shape: f32[1,96], index: 5, kind: input, shape index: {}]
  %s6 = inlined_call_operand.vmem [shape: f32[32,32], index: 6, kind: input, shape index: {}]
  %s7 = inlined_call_operand.vmem [shape: f32[1,32], index: 7, kind: input, shape index: {}]
  %s8 = inlined_call_operand.vmem [shape: f32[1,32], index: 8, kind: input, shape index: {}]
  %s9 = inlined_call_operand.vmem [shape: f32[1,32], index: 9, kind: input, shape index: {}]
  %s10 = inlined_call_operand.vmem [shape: f32[32,64], index: 10, kind: input, shape index: {}]
  %s11 = inlined_call_operand.vmem [shape: f32[1,64], index: 11, kind: input, shape index: {}]
  %s12 = inlined_call_operand.vmem [shape: f32[64,32], index: 12, kind: input, shape index: {}]
  %s13 = inlined_call_operand.vmem [shape: f32[1,32], index: 13, kind: input, shape index: {}]
  %s14 = inlined_call_operand.hbm [shape: f32[2,8,32], index: 14, kind: output, shape index: {}]
  %s15 = sld [smem:[#allocation0]]
  $region97: #{tpu_custom_call.1} parent=0
    _
  %s17 = ssub.s32 1, %s15
  %s18 = scalar_select 0, %s17, %s15
  $region1: #{tpu_custom_call.1} parent=0
    #allocation2 [shape = 'u8[8192]{0}', space=vmem, size = 0x2000, scoped, tag = 'input window, operand 0']
    #allocation3 [shape = 's32[2]{0}', space=sflag, size = 0x8, scoped, tag = 'scoped memory for tpu_custom_call.1']
    #allocation4 [shape = 's32[2]{0}', space=sflag, size = 0x8, scoped, tag = 'scoped memory for tpu_custom_call.1']
    #allocation5 [shape = 'u8[4096]{0}', space=vmem, size = 0x1000, scoped, tag = 'input window, operand 1, single buffered']
    #allocation6 [shape = 's32[1]{0}', space=sflag, size = 0x4, scoped, tag = 'scoped memory for tpu_custom_call.1']
    #allocation7 [shape = 'u8[8192]{0}', space=vmem, size = 0x2000, scoped, tag = 'output window, operand 0']
    %19 = vsyncpa [#allocation3], 0
    %s20 = scalar_lea.sflag [#allocation3], 1
    %21 = vsyncpa %s20, 0
    %22 = vsyncpa [#allocation6], 0
    %23 = vsyncpa [#allocation4], 0
    %s24 = scalar_lea.sflag [#allocation4], 1
    %25 = vsyncpa %s24, 0
    loop: start=0, step=1, limit=4
    $region2: #{tpu_custom_call.1} parent=1 // loop_pre_header
      _
    $region3: #{tpu_custom_call.1} parent=1 // loop_header
      %s27 = sphi 0, %s31
      %p28 = scmp.ge.s32.totalorder %s27, 4
      %s37 = sphi 0, %s39
      %s40 = sphi 0, %s37
      %s41 = sphi 0, %s40
      %s57 = sphi 0, %s41
      %s61 = sphi 0, %s61
      %s63 = sphi 0, %s61
      %s64 = sphi 0, %s63
      %s78 = sphi 0, %s64
      %s82 = sphi 0, %s82
      %s84 = sphi 0, %s82
      %s85 = sphi 0, %s84
      %s99 = sphi 0, %s85
      %s103 = sphi 0, %s103
      %s105 = sphi 0, %s103
      %s106 = sphi 0, %s105
      %s120 = sphi 0, %s106
      %s124 = sphi 0, %s124
      %s126 = sphi 0, %s124
      %s127 = sphi 0, %s126
      %s141 = sphi 0, %s127
      %s145 = sphi 0, %s145
      %s147 = sphi 0, %s145
      %s148 = sphi 0, %s147
      %s162 = sphi 0, %s148
      %s166 = sphi 0, %s166
      %s168 = sphi 0, %s166
      %s169 = sphi 0, %s168
      %s183 = sphi 0, %s169
      %s187 = sphi 0, %s187
      %s189 = sphi 0, %s187
      %s190 = sphi 0, %s189
      %s204 = sphi 0, %s190
      %s208 = sphi 0, %s208
      %s210 = sphi 0, %s208
      %s211 = sphi 0, %s210
      %s225 = sphi 0, %s211
      %s229 = sphi 0, %s229
      %s231 = sphi 0, %s229
      %s232 = sphi 0, %s231
      %s246 = sphi 0, %s232
      %s250 = sphi 0, %s250
      %s252 = sphi 0, %s250
      %s253 = sphi 0, %s252
      %s267 = sphi 0, %s253
      %s271 = sphi 0, %s271
      %s273 = sphi 0, %s271
      %s274 = sphi 0, %s273
      %s288 = sphi 0, %s274
      %s292 = sphi 0, %s292
      %s294 = sphi 0, %s292
      %s295 = sphi 0, %s294
      %s309 = sphi 0, %s295
      %s313 = sphi 0, %s313
      %s315 = sphi 0, %s313
      %s316 = sphi 0, %s315
      %s330 = sphi 0, %s316
      %s336 = sphi 0, %s338
      %s339 = sphi 0, %s336
      %s340 = sphi 0, %s339
      %s356 = sphi 0, %s340
    $region4: #{tpu_custom_call.1} parent=1 // loop_header_branch
      %30 = sbr.rel (%p28) target = $region8
    $region5: #{tpu_custom_call.1} parent=1 // loop_body
      %s32 = ssub.s32 %s27, 1
      %s33 = ssub.s32 %s27, 2
      %s34 = sadd.s32 %s27, 1
      %s35 = ssub.s32 %s27, %s34
      %p36 = scmp.eq.s32.totalorder %s35, 0
      %s38 = sadd.s32 %s37, 1
      %s39 = scalar_select %p36, %s37, %s38
      %p42 = pneg %p36
      %p43 = scmp.eq.s32.totalorder %s27, 1
      %p44 = por %p42, %p43
      %p45 = scmp.ne.s32.totalorder %s37, %s40
      %p46 = scmp.eq.s32.totalorder %s27, 0
      %p47 = por %p45, %p46
      %p48 = scmp.ne.s32.totalorder %s37, %s40
      %p49 = scmp.eq.s32.totalorder %s32, 1
      %p50 = por %p48, %p49
      %p51 = scmp.ne.s32.totalorder %s40, %s41
      %p52 = scmp.eq.s32.totalorder %s32, 0
      %p53 = por %p51, %p52
      %p54 = scmp.ne.s32.totalorder %s40, %s41
      %p55 = scmp.eq.s32.totalorder %s33, 1
      %p56 = por %p54, %p55
      %p58 = scmp.ne.s32.totalorder %s41, %s57
      %p59 = scmp.eq.s32.totalorder %s33, 0
      %p60 = por %p58, %p59
      %s62 = sadd.s32 %s61, 1
      %p65 = scmp.eq.s32.totalorder %s27, 1
      %p66 = scmp.ne.s32.totalorder %s61, %s63
      %p67 = scmp.eq.s32.totalorder %s27, 0
      %p68 = por %p66, %p67
      %p69 = scmp.ne.s32.totalorder %s61, %s63
      %p70 = scmp.eq.s32.totalorder %s32, 1
      %p71 = por %p69, %p70
      %p72 = scmp.ne.s32.totalorder %s63, %s64
      %p73 = scmp.eq.s32.totalorder %s32, 0
      %p74 = por %p72, %p73
      %p75 = scmp.ne.s32.totalorder %s63, %s64
      %p76 = scmp.eq.s32.totalorder %s33, 1
      %p77 = por %p75, %p76
      %p79 = scmp.ne.s32.totalorder %s64, %s78
      %p80 = scmp.eq.s32.totalorder %s33, 0
      %p81 = por %p79, %p80
      %s83 = sadd.s32 %s82, 1
      %p86 = scmp.eq.s32.totalorder %s27, 1
      %p87 = scmp.ne.s32.totalorder %s82, %s84
      %p88 = scmp.eq.s32.totalorder %s27, 0
      %p89 = por %p87, %p88
      %p90 = scmp.ne.s32.totalorder %s82, %s84
      %p91 = scmp.eq.s32.totalorder %s32, 1
      %p92 = por %p90, %p91
      %p93 = scmp.ne.s32.totalorder %s84, %s85
      %p94 = scmp.eq.s32.totalorder %s32, 0
      %p95 = por %p93, %p94
      %p96 = scmp.ne.s32.totalorder %s84, %s85
      %p97 = scmp.eq.s32.totalorder %s33, 1
      %p98 = por %p96, %p97
      %p100 = scmp.ne.s32.totalorder %s85, %s99
      %p101 = scmp.eq.s32.totalorder %s33, 0
      %p102 = por %p100, %p101
      %s104 = sadd.s32 %s103, 1
      %p107 = scmp.eq.s32.totalorder %s27, 1
      %p108 = scmp.ne.s32.totalorder %s103, %s105
      %p109 = scmp.eq.s32.totalorder %s27, 0
      %p110 = por %p108, %p109
      %p111 = scmp.ne.s32.totalorder %s103, %s105
      %p112 = scmp.eq.s32.totalorder %s32, 1
      %p113 = por %p111, %p112
      %p114 = scmp.ne.s32.totalorder %s105, %s106
      %p115 = scmp.eq.s32.totalorder %s32, 0
      %p116 = por %p114, %p115
      %p117 = scmp.ne.s32.totalorder %s105, %s106
      %p118 = scmp.eq.s32.totalorder %s33, 1
      %p119 = por %p117, %p118
      %p121 = scmp.ne.s32.totalorder %s106, %s120
      %p122 = scmp.eq.s32.totalorder %s33, 0
      %p123 = por %p121, %p122
      %s125 = sadd.s32 %s124, 1
      %p128 = scmp.eq.s32.totalorder %s27, 1
      %p129 = scmp.ne.s32.totalorder %s124, %s126
      %p130 = scmp.eq.s32.totalorder %s27, 0
      %p131 = por %p129, %p130
      %p132 = scmp.ne.s32.totalorder %s124, %s126
      %p133 = scmp.eq.s32.totalorder %s32, 1
      %p134 = por %p132, %p133
      %p135 = scmp.ne.s32.totalorder %s126, %s127
      %p136 = scmp.eq.s32.totalorder %s32, 0
      %p137 = por %p135, %p136
      %p138 = scmp.ne.s32.totalorder %s126, %s127
      %p139 = scmp.eq.s32.totalorder %s33, 1
      %p140 = por %p138, %p139
      %p142 = scmp.ne.s32.totalorder %s127, %s141
      %p143 = scmp.eq.s32.totalorder %s33, 0
      %p144 = por %p142, %p143
      %s146 = sadd.s32 %s145, 1
      %p149 = scmp.eq.s32.totalorder %s27, 1
      %p150 = scmp.ne.s32.totalorder %s145, %s147
      %p151 = scmp.eq.s32.totalorder %s27, 0
      %p152 = por %p150, %p151
      %p153 = scmp.ne.s32.totalorder %s145, %s147
      %p154 = scmp.eq.s32.totalorder %s32, 1
      %p155 = por %p153, %p154
      %p156 = scmp.ne.s32.totalorder %s147, %s148
      %p157 = scmp.eq.s32.totalorder %s32, 0
      %p158 = por %p156, %p157
      %p159 = scmp.ne.s32.totalorder %s147, %s148
      %p160 = scmp.eq.s32.totalorder %s33, 1
      %p161 = por %p159, %p160
      %p163 = scmp.ne.s32.totalorder %s148, %s162
      %p164 = scmp.eq.s32.totalorder %s33, 0
      %p165 = por %p163, %p164
      %s167 = sadd.s32 %s166, 1
      %p170 = scmp.eq.s32.totalorder %s27, 1
      %p171 = scmp.ne.s32.totalorder %s166, %s168
      %p172 = scmp.eq.s32.totalorder %s27, 0
      %p173 = por %p171, %p172
      %p174 = scmp.ne.s32.totalorder %s166, %s168
      %p175 = scmp.eq.s32.totalorder %s32, 1
      %p176 = por %p174, %p175
      %p177 = scmp.ne.s32.totalorder %s168, %s169
      %p178 = scmp.eq.s32.totalorder %s32, 0
      %p179 = por %p177, %p178
      %p180 = scmp.ne.s32.totalorder %s168, %s169
      %p181 = scmp.eq.s32.totalorder %s33, 1
      %p182 = por %p180, %p181
      %p184 = scmp.ne.s32.totalorder %s169, %s183
      %p185 = scmp.eq.s32.totalorder %s33, 0
      %p186 = por %p184, %p185
      %s188 = sadd.s32 %s187, 1
      %p191 = scmp.eq.s32.totalorder %s27, 1
      %p192 = scmp.ne.s32.totalorder %s187, %s189
      %p193 = scmp.eq.s32.totalorder %s27, 0
      %p194 = por %p192, %p193
      %p195 = scmp.ne.s32.totalorder %s187, %s189
      %p196 = scmp.eq.s32.totalorder %s32, 1
      %p197 = por %p195, %p196
      %p198 = scmp.ne.s32.totalorder %s189, %s190
      %p199 = scmp.eq.s32.totalorder %s32, 0
      %p200 = por %p198, %p199
      %p201 = scmp.ne.s32.totalorder %s189, %s190
      %p202 = scmp.eq.s32.totalorder %s33, 1
      %p203 = por %p201, %p202
      %p205 = scmp.ne.s32.totalorder %s190, %s204
      %p206 = scmp.eq.s32.totalorder %s33, 0
      %p207 = por %p205, %p206
      %s209 = sadd.s32 %s208, 1
      %p212 = scmp.eq.s32.totalorder %s27, 1
      %p213 = scmp.ne.s32.totalorder %s208, %s210
      %p214 = scmp.eq.s32.totalorder %s27, 0
      %p215 = por %p213, %p214
      %p216 = scmp.ne.s32.totalorder %s208, %s210
      %p217 = scmp.eq.s32.totalorder %s32, 1
      %p218 = por %p216, %p217
      %p219 = scmp.ne.s32.totalorder %s210, %s211
      %p220 = scmp.eq.s32.totalorder %s32, 0
      %p221 = por %p219, %p220
      %p222 = scmp.ne.s32.totalorder %s210, %s211
      %p223 = scmp.eq.s32.totalorder %s33, 1
      %p224 = por %p222, %p223
      %p226 = scmp.ne.s32.totalorder %s211, %s225
      %p227 = scmp.eq.s32.totalorder %s33, 0
      %p228 = por %p226, %p227
      %s230 = sadd.s32 %s229, 1
      %p233 = scmp.eq.s32.totalorder %s27, 1
      %p234 = scmp.ne.s32.totalorder %s229, %s231
      %p235 = scmp.eq.s32.totalorder %s27, 0
      %p236 = por %p234, %p235
      %p237 = scmp.ne.s32.totalorder %s229, %s231
      %p238 = scmp.eq.s32.totalorder %s32, 1
      %p239 = por %p237, %p238
      %p240 = scmp.ne.s32.totalorder %s231, %s232
      %p241 = scmp.eq.s32.totalorder %s32, 0
      %p242 = por %p240, %p241
      %p243 = scmp.ne.s32.totalorder %s231, %s232
      %p244 = scmp.eq.s32.totalorder %s33, 1
      %p245 = por %p243, %p244
      %p247 = scmp.ne.s32.totalorder %s232, %s246
      %p248 = scmp.eq.s32.totalorder %s33, 0
      %p249 = por %p247, %p248
      %s251 = sadd.s32 %s250, 1
      %p254 = scmp.eq.s32.totalorder %s27, 1
      %p255 = scmp.ne.s32.totalorder %s250, %s252
      %p256 = scmp.eq.s32.totalorder %s27, 0
      %p257 = por %p255, %p256
      %p258 = scmp.ne.s32.totalorder %s250, %s252
      %p259 = scmp.eq.s32.totalorder %s32, 1
      %p260 = por %p258, %p259
      %p261 = scmp.ne.s32.totalorder %s252, %s253
      %p262 = scmp.eq.s32.totalorder %s32, 0
      %p263 = por %p261, %p262
      %p264 = scmp.ne.s32.totalorder %s252, %s253
      %p265 = scmp.eq.s32.totalorder %s33, 1
      %p266 = por %p264, %p265
      %p268 = scmp.ne.s32.totalorder %s253, %s267
      %p269 = scmp.eq.s32.totalorder %s33, 0
      %p270 = por %p268, %p269
      %s272 = sadd.s32 %s271, 1
      %p275 = scmp.eq.s32.totalorder %s27, 1
      %p276 = scmp.ne.s32.totalorder %s271, %s273
      %p277 = scmp.eq.s32.totalorder %s27, 0
      %p278 = por %p276, %p277
      %p279 = scmp.ne.s32.totalorder %s271, %s273
      %p280 = scmp.eq.s32.totalorder %s32, 1
      %p281 = por %p279, %p280
      %p282 = scmp.ne.s32.totalorder %s273, %s274
      %p283 = scmp.eq.s32.totalorder %s32, 0
      %p284 = por %p282, %p283
      %p285 = scmp.ne.s32.totalorder %s273, %s274
      %p286 = scmp.eq.s32.totalorder %s33, 1
      %p287 = por %p285, %p286
      %p289 = scmp.ne.s32.totalorder %s274, %s288
      %p290 = scmp.eq.s32.totalorder %s33, 0
      %p291 = por %p289, %p290
      %s293 = sadd.s32 %s292, 1
      %p296 = scmp.eq.s32.totalorder %s27, 1
      %p297 = scmp.ne.s32.totalorder %s292, %s294
      %p298 = scmp.eq.s32.totalorder %s27, 0
      %p299 = por %p297, %p298
      %p300 = scmp.ne.s32.totalorder %s292, %s294
      %p301 = scmp.eq.s32.totalorder %s32, 1
      %p302 = por %p300, %p301
      %p303 = scmp.ne.s32.totalorder %s294, %s295
      %p304 = scmp.eq.s32.totalorder %s32, 0
      %p305 = por %p303, %p304
      %p306 = scmp.ne.s32.totalorder %s294, %s295
      %p307 = scmp.eq.s32.totalorder %s33, 1
      %p308 = por %p306, %p307
      %p310 = scmp.ne.s32.totalorder %s295, %s309
      %p311 = scmp.eq.s32.totalorder %s33, 0
      %p312 = por %p310, %p311
      %s314 = sadd.s32 %s313, 1
      %p317 = scmp.eq.s32.totalorder %s27, 1
      %p318 = scmp.ne.s32.totalorder %s313, %s315
      %p319 = scmp.eq.s32.totalorder %s27, 0
      %p320 = por %p318, %p319
      %p321 = scmp.ne.s32.totalorder %s313, %s315
      %p322 = scmp.eq.s32.totalorder %s32, 1
      %p323 = por %p321, %p322
      %p324 = scmp.ne.s32.totalorder %s315, %s316
      %p325 = scmp.eq.s32.totalorder %s32, 0
      %p326 = por %p324, %p325
      %p327 = scmp.ne.s32.totalorder %s315, %s316
      %p328 = scmp.eq.s32.totalorder %s33, 1
      %p329 = por %p327, %p328
      %p331 = scmp.ne.s32.totalorder %s316, %s330
      %p332 = scmp.eq.s32.totalorder %s33, 0
      %p333 = por %p331, %p332
      %s334 = ssub.s32 %s27, %s34
      %p335 = scmp.eq.s32.totalorder %s334, 0
      %s337 = sadd.s32 %s336, 1
      %s338 = scalar_select %p335, %s336, %s337
      %p341 = pneg %p335
      %p342 = scmp.eq.s32.totalorder %s27, 1
      %p343 = por %p341, %p342
      %p344 = scmp.ne.s32.totalorder %s336, %s339
      %p345 = scmp.eq.s32.totalorder %s27, 0
      %p346 = por %p344, %p345
      %p347 = scmp.ne.s32.totalorder %s336, %s339
      %p348 = scmp.eq.s32.totalorder %s32, 1
      %p349 = por %p347, %p348
      %p350 = scmp.ne.s32.totalorder %s339, %s340
      %p351 = scmp.eq.s32.totalorder %s32, 0
      %p352 = por %p350, %p351
      %p353 = scmp.ne.s32.totalorder %s339, %s340
      %p354 = scmp.eq.s32.totalorder %s33, 1
      %p355 = por %p353, %p354
      %p357 = scmp.ne.s32.totalorder %s340, %s356
      %p358 = scmp.eq.s32.totalorder %s33, 0
      %p359 = por %p357, %p358
      %p360 = scmp.le.s32.totalorder 1, %s27
      %p361 = scmp.lt.s32.totalorder %s27, 3
      %p362 = pnand %p360, %p361
      %p363 = pneg %p362
      // Predicated region
      $region9: #{tpu_custom_call.1} parent=5 // pred_check
        _
      $region10: #{tpu_custom_call.1} parent=5 // pred_check_branch
        %365 = sbr.rel (%p362) target = $region12
      $region11: #{tpu_custom_call.1} parent=5 // pred_region
        %s366 = ssub.s32 %s27, 1
        // Predicated region
        $region13: #{tpu_custom_call.1} parent=11 // pred_check
          %p367 = pneg %p74
        $region14: #{tpu_custom_call.1} parent=11 // pred_check_branch
          %369 = sbr.rel (%p367) target = $region16
        $region15: #{tpu_custom_call.1} parent=11 // pred_region
          %s371 = ssub.s32 128, 128
          %372 = vsyncadd [#allocation6], %s371
          %s374 = sshll.u32 [#allocation5], 4
          %s375 = int_to_ptr.vmem [resolvable:$true] %s374
          %377 = dma.hbm_to_vmem [thread:$0]  %s1, 128, %s375, [#allocation6]
        $region16: #{tpu_custom_call.1} parent=11 // pred_fallthru
          _
        // Predicated region
        $region17: #{tpu_custom_call.1} parent=11 // pred_check
          %p378 = pneg %p95
        $region18: #{tpu_custom_call.1} parent=11 // pred_check_branch
          %380 = sbr.rel (%p378) target = $region20
        $region19: #{tpu_custom_call.1} parent=11 // pred_region
          _
        $region20: #{tpu_custom_call.1} parent=11 // pred_fallthru
          _
        // Predicated region
        $region21: #{tpu_custom_call.1} parent=11 // pred_check
          %p381 = pneg %p116
        $region22: #{tpu_custom_call.1} parent=11 // pred_check_branch
          %383 = sbr.rel (%p381) target = $region24
        $region23: #{tpu_custom_call.1} parent=11 // pred_region
          _
        $region24: #{tpu_custom_call.1} parent=11 // pred_fallthru
          _
        // Predicated region
        $region25: #{tpu_custom_call.1} parent=11 // pred_check
          %p384 = pneg %p137
        $region26: #{tpu_custom_call.1} parent=11 // pred_check_branch
          %386 = sbr.rel (%p384) target = $region28
        $region27: #{tpu_custom_call.1} parent=11 // pred_region
          _
        $region28: #{tpu_custom_call.1} parent=11 // pred_fallthru
          _
        // Predicated region
        $region29: #{tpu_custom_call.1} parent=11 // pred_check
          %p387 = pneg %p158
        $region30: #{tpu_custom_call.1} parent=11 // pred_check_branch
          %389 = sbr.rel (%p387) target = $region32
        $region31: #{tpu_custom_call.1} parent=11 // pred_region
          _
        $region32: #{tpu_custom_call.1} parent=11 // pred_fallthru
          _
        // Predicated region
        $region33: #{tpu_custom_call.1} parent=11 // pred_check
          %p390 = pneg %p179
        $region34: #{tpu_custom_call.1} parent=11 // pred_check_branch
          %392 = sbr.rel (%p390) target = $region36
        $region35: #{tpu_custom_call.1} parent=11 // pred_region
          _
        $region36: #{tpu_custom_call.1} parent=11 // pred_fallthru
          _
        // Predicated region
        $region37: #{tpu_custom_call.1} parent=11 // pred_check
          %p393 = pneg %p200
        $region38: #{tpu_custom_call.1} parent=11 // pred_check_branch
          %395 = sbr.rel (%p393) target = $region40
        $region39: #{tpu_custom_call.1} parent=11 // pred_region
          _
        $region40: #{tpu_custom_call.1} parent=11 // pred_fallthru
          _
        // Predicated region
        $region41: #{tpu_custom_call.1} parent=11 // pred_check
          %p396 = pneg %p221
        $region42: #{tpu_custom_call.1} parent=11 // pred_check_branch
          %398 = sbr.rel (%p396) target = $region44
        $region43: #{tpu_custom_call.1} parent=11 // pred_region
          _
        $region44: #{tpu_custom_call.1} parent=11 // pred_fallthru
          _
        // Predicated region
        $region45: #{tpu_custom_call.1} parent=11 // pred_check
          %p399 = pneg %p242
        $region46: #{tpu_custom_call.1} parent=11 // pred_check_branch
          %401 = sbr.rel (%p399) target = $region48
        $region47: #{tpu_custom_call.1} parent=11 // pred_region
          _
        $region48: #{tpu_custom_call.1} parent=11 // pred_fallthru
          _
        // Predicated region
        $region49: #{tpu_custom_call.1} parent=11 // pred_check
          %p402 = pneg %p263
        $region50: #{tpu_custom_call.1} parent=11 // pred_check_branch
          %404 = sbr.rel (%p402) target = $region52
        $region51: #{tpu_custom_call.1} parent=11 // pred_region
          _
        $region52: #{tpu_custom_call.1} parent=11 // pred_fallthru
          _
        // Predicated region
        $region53: #{tpu_custom_call.1} parent=11 // pred_check
          %p405 = pneg %p284
        $region54: #{tpu_custom_call.1} parent=11 // pred_check_branch
          %407 = sbr.rel (%p405) target = $region56
        $region55: #{tpu_custom_call.1} parent=11 // pred_region
          _
        $region56: #{tpu_custom_call.1} parent=11 // pred_fallthru
          _
        // Predicated region
        $region57: #{tpu_custom_call.1} parent=11 // pred_check
          %p408 = pneg %p305
        $region58: #{tpu_custom_call.1} parent=11 // pred_check_branch
          %410 = sbr.rel (%p408) target = $region60
        $region59: #{tpu_custom_call.1} parent=11 // pred_region
          _
        $region60: #{tpu_custom_call.1} parent=11 // pred_fallthru
          _
        // Predicated region
        $region61: #{tpu_custom_call.1} parent=11 // pred_check
          %p411 = pneg %p326
        $region62: #{tpu_custom_call.1} parent=11 // pred_check_branch
          %413 = sbr.rel (%p411) target = $region64
        $region63: #{tpu_custom_call.1} parent=11 // pred_region
          _
        $region64: #{tpu_custom_call.1} parent=11 // pred_fallthru
          _
      $region12: #{tpu_custom_call.1} parent=5 // pred_fallthru
        _
      %p414 = scmp.lt.s32.totalorder %s27, 2
      // Predicated region
      $region65: #{tpu_custom_call.1} parent=5 // pred_check
        %p415 = pneg %p414
      $region66: #{tpu_custom_call.1} parent=5 // pred_check_branch
        %417 = sbr.rel (%p415) target = $region68
      $region67: #{tpu_custom_call.1} parent=5 // pred_region
        // Predicated region
        $region69: #{tpu_custom_call.1} parent=67 // pred_check
          %p418 = pneg %p47
        $region70: #{tpu_custom_call.1} parent=67 // pred_check_branch
          %420 = sbr.rel (%p418) target = $region72
        $region71: #{tpu_custom_call.1} parent=67 // pred_region
          %s421 = sand.u32 %s37, 1
          %s422 = scalar_lea.sflag [#allocation3], %s421
          %s423 = sand.u32 %s37, 1
          %s424 = smul.addr %s423, 8
          %s425 = scalar_lea.vmem [#allocation2], %s424
          %s427 = ssub.s32 128, 128
          %428 = vsyncadd %s422, %s427
          %s429 = smul.addr %s27, 128
          %s430 = scalar_lea.hbm %s0, %s429
          %s432 = sshll.u32 %s425, 4
          %s433 = int_to_ptr.vmem [resolvable:$true] %s432
          %435 = dma.hbm_to_vmem [thread:$0]  %s430, 128, %s433, %s422
        $region72: #{tpu_custom_call.1} parent=67 // pred_fallthru
          _
      $region68: #{tpu_custom_call.1} parent=5 // pred_fallthru
        _
      %p436 = scmp.le.s32.totalorder 1, %s27
      %p437 = scmp.lt.s32.totalorder %s27, 3
      %p438 = pnand %p436, %p437
      %p439 = pneg %p438
      // Predicated region
      $region73: #{tpu_custom_call.1} parent=5 // pred_check
        _
      $region74: #{tpu_custom_call.1} parent=5 // pred_check_branch
        %441 = sbr.rel (%p438) target = $region76
      $region75: #{tpu_custom_call.1} parent=5 // pred_region
        %s442 = ssub.s32 %s27, 1
        %s443 = sand.u32 %s40, 1
        %s444 = scalar_lea.sflag [#allocation3], %s443
        %s445 = sand.u32 %s40, 1
        %s446 = smul.addr %s445, 8
        %s447 = scalar_lea.vmem [#allocation2], %s446
        // Predicated region
        $region77: #{tpu_custom_call.1} parent=75 // pred_check
          %p448 = pneg %p53
        $region78: #{tpu_custom_call.1} parent=75 // pred_check_branch
          %450 = sbr.rel (%p448) target = $region80
        $region79: #{tpu_custom_call.1} parent=75 // pred_region
          %451 = dma.done %s444, 128
        $region80: #{tpu_custom_call.1} parent=75 // pred_fallthru
          _
        // Predicated region
        $region81: #{tpu_custom_call.1} parent=75 // pred_check
          %p452 = pneg %p74
        $region82: #{tpu_custom_call.1} parent=75 // pred_check_branch
          %454 = sbr.rel (%p452) target = $region84
        $region83: #{tpu_custom_call.1} parent=75 // pred_region
          %455 = dma.done [#allocation6], 128
        $region84: #{tpu_custom_call.1} parent=75 // pred_fallthru
          _
        %s456 = sand.u32 %s40, 1
        %s457 = scalar_lea.sflag [#allocation3], %s456
        %s458 = sand.u32 %s40, 1
        %s459 = smul.addr %s458, 8
        %s460 = scalar_lea.vmem [#allocation2], %s459
        %p461 = pneg %p53
        %p462 = pneg %p50
        %p463 = pneg %p74
        %p464 = pneg %p71
        %p465 = pneg %p95
        %p466 = pneg %p92
        %p467 = pneg %p116
        %p468 = pneg %p113
        %p469 = pneg %p137
        %p470 = pneg %p134
        %p471 = pneg %p158
        %p472 = pneg %p155
        %p473 = pneg %p179
        %p474 = pneg %p176
        %p475 = pneg %p200
        %p476 = pneg %p197
        %p477 = pneg %p221
        %p478 = pneg %p218
        %p479 = pneg %p242
        %p480 = pneg %p239
        %p481 = pneg %p263
        %p482 = pneg %p260
        %p483 = pneg %p284
        %p484 = pneg %p281
        %p485 = pneg %p305
        %p486 = pneg %p302
        %p487 = pneg %p326
        %p488 = pneg %p323
        %p489 = pneg %p352
        %p490 = pneg %p349
        %s491 = sand.u32 %s339, 1
        %s492 = scalar_lea.sflag [#allocation4], %s491
        %s493 = sand.u32 %s339, 1
        %s494 = smul.addr %s493, 8
        %s495 = scalar_lea.vmem [#allocation7], %s494
        %v496 = vld [vmem:[%s447] sm:$0xff]
        %vm497 = vcmask 261120
        %v498 = vsel %vm497, %v496, 0.0
        %499 = vadd.xlane.f32.xlu0 %v498
        %v500 = vpop.xlane.xlu0 %499
        %v501 = vrcp.pop 32.0
        %v502 = vmul.f32 %v500, %v501
        %v503 = vsub.f32 %v496, %v502
        %v504 = vmul.f32 %v503, %v503
        %v505 = vsel %vm497, %v504, 0.0
        %506 = vadd.xlane.f32.xlu0 %v505
        %v507 = vpop.xlane.xlu0 %506
        %v508 = vmul.f32 %v507, %v501
        %v509 = vadd.f32 %v508, 1e-05
        %v510 = vrsqrt.pop %v509
        %v511 = vmul.f32 %v503, %v510
        %v512 = vld [vmem:[%s2] sm:$0x1]
        %v514 = vlaneseq
        %v515 = vshrl.u32 %v514, 7
        %v516 = vsub.s32 0, %v515
        %v517 = vrot.slane %v512, %v516
        %v519 = vmul.f32 %v511, %v517
        %v520 = vld [vmem:[%s3] sm:$0x1]
        %v522 = vlaneseq
        %v523 = vshrl.u32 %v522, 7
        %v524 = vsub.s32 0, %v523
        %v525 = vrot.slane %v520, %v524
        %v527 = vadd.f32 %v519, %v525
        %v528 = vld [vmem:[%s4] sm:$0xff]
        %v529 = vld [vmem:[%s4 + $0x8] sm:$0xff]
        %v530 = vld [vmem:[%s4 + $0x10] sm:$0xff]
        %v531 = vld [vmem:[%s4 + $0x18] sm:$0xff]
        %v532 = vld [vmem:[%s5] sm:$0x1]
        %v534 = vlaneseq
        %v535 = vshrl.u32 %v534, 7
        %v536 = vsub.s32 0, %v535
        %v537 = vrot.slane %v532, %v536
        %v540 = vsel %vm497, %v527, 0
        %542 = vmatprep.subr.mxu0 0.0
        %543 = vmatpush1.msra.mxu0 %v528
        %544 = vmatprep.subr.mxu0 0.0
        %545 = vmatpush1.msra.mxu0 %v529
        %546 = vmatprep.subr.mxu0 0.0
        %547 = vmatpush1.msra.mxu0 %v530
        %548 = vmatprep.subr.mxu0 0.0
        %549 = vmatpush1.msra.mxu0 %v531
        %550 = vmatprep.subr.mxu0 0.0
        %551 = vmatpush1.msra.mxu0 0.0
        %552 = vmatprep.subr.mxu0 0.0
        %553 = vmatpush1.msra.mxu0 0.0
        %554 = vmatprep.subr.mxu0 0.0
        %555 = vmatpush1.msra.mxu0 0.0
        %556 = vmatprep.subr.mxu0 0.0
        %557 = vmatpush1.msra.mxu0 0.0
        %558 = vmatprep.subr.mxu0 0.0
        %559 = vmatpush1.msra.mxu0 0.0
        %560 = vmatprep.subr.mxu0 0.0
        %561 = vmatpush1.msra.mxu0 0.0
        %562 = vmatprep.subr.mxu0 0.0
        %563 = vmatpush1.msra.mxu0 0.0
        %564 = vmatprep.subr.mxu0 0.0
        %565 = vmatpush1.msra.mxu0 0.0
        %566 = vmatprep.subr.mxu0 0.0
        %567 = vmatpush1.msra.mxu0 0.0
        %568 = vmatprep.subr.mxu0 0.0
        %569 = vmatpush1.msra.mxu0 0.0
        %570 = vmatprep.subr.mxu0 0.0
        %571 = vmatpush1.msra.mxu0 0.0
        %572 = vmatprep.subr.mxu0 0.0
        %573 = vmatpush1.msra.mxu0 0.0
        %574 = vmatprep.subr.mxu0 0.0
        %575 = vmatpush1.msra.mxu0 0.0
        %576 = vmatprep.subr.mxu0 0.0
        %577 = vmatpush1.msra.mxu0 0.0
        %578 = vmatprep.subr.mxu0 0.0
        %579 = vmatpush1.msra.mxu0 0.0
        %580 = vmatprep.subr.mxu0 0.0
        %581 = vmatpush1.msra.mxu0 0.0
        %582 = vmatprep.subr.mxu0 0.0
        %583 = vmatpush1.msra.mxu0 0.0
        %584 = vmatprep.subr.mxu0 0.0
        %585 = vmatpush1.msra.mxu0 0.0
        %586 = vmatprep.subr.mxu0 0.0
        %587 = vmatpush1.msra.mxu0 0.0
        %588 = vmatprep.subr.mxu0 0.0
        %589 = vmatpush1.msra.mxu0 0.0
        %590 = vmatprep.subr.mxu0 0.0
        %591 = vmatpush1.msra.mxu0 0.0
        %592 = vmatprep.subr.mxu0 0.0
        %593 = vmatpush1.msra.mxu0 0.0
        %594 = vmatprep.subr.mxu0 0.0
        %595 = vmatpush1.msra.mxu0 0.0
        %596 = vmatprep.subr.mxu0 0.0
        %597 = vmatpush1.msra.mxu0 0.0
        %598 = vmatprep.subr.mxu0 0.0
        %599 = vmatpush1.msra.mxu0 0.0
        %600 = vmatprep.subr.mxu0 0.0
        %601 = vmatpush1.msra.mxu0 0.0
        %602 = vmatprep.subr.mxu0 0.0
        %603 = vmatpush1.msra.mxu0 0.0
        %604 = vmatprep.subr.mxu0 0.0
        %605 = vmatpush1.msra.mxu0 0.0
        %606 = vmatprep.mubr.f32.mxu0 0.0
        %607 = vmatmul.mubr.f32.gmra.mrb[0].mxu0 %v540
        %v608 = vpop.f32.mrb[0].mxu0
        %v609 = vadd.f32 %v537, %v608
        %v610 = vpop.f32.mrb[0].mxu0
        %611 = vdwg.mxu0
        %vm612 = vcmask 785920
        %v613 = vsel %vm612, %v609, 0.0
        %v614 = vrot.slane %v613, 4
        %v615 = vadd.f32 %v613, %v614
        %v616 = vrot.slane %v615, 2
        %v617 = vadd.f32 %v615, %v616
        %v618 = vrot.slane %v617, 1
        %v619 = vadd.f32 %v617, %v618
        %v620 = vld [vmem:[#allocation5] sm:$0xff]
        %622 = vrot.lane.b32.xlu0 %v619, 64
        %v623 = vpop.permute.xlu0 %622
        %625 = vrot.lane.b32.xlu0 %v619, 72
        %v626 = vpop.permute.xlu0 %625
        %628 = vrot.lane.b32.xlu0 %v619, 80
        %v629 = vpop.permute.xlu0 %628
        %631 = vrot.lane.b32.xlu0 %v619, 88
        %v632 = vpop.permute.xlu0 %631
        %vm634 = vcmask 64512
        %v635 = vsel %vm634, %v623, %v626
        %vm636 = vcmask 130048
        %v637 = vsel %vm636, %v635, %v629
        %vm638 = vcmask 195584
        %v639 = vsel %vm638, %v637, %v632
        %vm640 = vcmp.eq.s32.totalorder %v620, 0
        %v641 = vlaneseq
        %v642 = vshrl.u32 %v641, 7
        %v643 = vsub.s32 0, %v642
        %v644 = vrot.slane %v639, %v643
        %v645 = vsel %vm640, %v644, 0.0
        %v646 = vadd.f32 %v645, 0.0
        %647 = vrot.lane.b32.xlu0 %v619, 56
        %v648 = vpop.permute.xlu0 %647
        %v650 = vsel %vm634, %v648, %v623
        %v651 = vsel %vm636, %v650, %v626
        %v652 = vsel %vm638, %v651, %v629
        %vm653 = vcmp.eq.s32.totalorder %v620, 1
        %v654 = vlaneseq
        %v655 = vshrl.u32 %v654, 7
        %v656 = vsub.s32 0, %v655
        %v657 = vrot.slane %v652, %v656
        %v658 = vsel %vm653, %v657, 0.0
        %v659 = vadd.f32 %v646, %v658
        %660 = vrot.lane.b32.xlu0 %v619, 48
        %v661 = vpop.permute.xlu0 %660
        %v663 = vsel %vm634, %v661, %v648
        %v664 = vsel %vm636, %v663, %v623
        %v665 = vsel %vm638, %v664, %v626
        %vm666 = vcmp.eq.s32.totalorder %v620, 2
        %v667 = vlaneseq
        %v668 = vshrl.u32 %v667, 7
        %v669 = vsub.s32 0, %v668
        %v670 = vrot.slane %v665, %v669
        %v671 = vsel %vm666, %v670, 0.0
        %v672 = vadd.f32 %v659, %v671
        %673 = vrot.lane.b32.xlu0 %v619, 40
        %v674 = vpop.permute.xlu0 %673
        %v676 = vsel %vm634, %v674, %v661
        %v677 = vsel %vm636, %v676, %v648
        %v678 = vsel %vm638, %v677, %v623
        %vm679 = vcmp.eq.s32.totalorder %v620, 3
        %v680 = vlaneseq
        %v681 = vshrl.u32 %v680, 7
        %v682 = vsub.s32 0, %v681
        %v683 = vrot.slane %v678, %v682
        %v684 = vsel %vm679, %v683, 0.0
        %v685 = vadd.f32 %v672, %v684
        %v686 = vld [vmem:[%s6] sm:$0xff]
        %v687 = vld [vmem:[%s6 + $0x8] sm:$0xff]
        %v688 = vld [vmem:[%s6 + $0x10] sm:$0xff]
        %v689 = vld [vmem:[%s6 + $0x18] sm:$0xff]
        %v690 = vld [vmem:[%s7] sm:$0x1]
        %v692 = vlaneseq
        %v693 = vshrl.u32 %v692, 7
        %v694 = vsub.s32 0, %v693
        %v695 = vrot.slane %v690, %v694
        %v698 = vsel %vm497, %v685, 0
        %700 = vmatprep.subr.mxu0 0.0
        %701 = vmatpush1.msra.mxu0 %v686
        %702 = vmatprep.subr.mxu0 0.0
        %703 = vmatpush1.msra.mxu0 %v687
        %704 = vmatprep.subr.mxu0 0.0
        %705 = vmatpush1.msra.mxu0 %v688
        %706 = vmatprep.subr.mxu0 0.0
        %707 = vmatpush1.msra.mxu0 %v689
        %708 = vmatprep.subr.mxu0 0.0
        %709 = vmatpush1.msra.mxu0 0.0
        %710 = vmatprep.subr.mxu0 0.0
        %711 = vmatpush1.msra.mxu0 0.0
        %712 = vmatprep.subr.mxu0 0.0
        %713 = vmatpush1.msra.mxu0 0.0
        %714 = vmatprep.subr.mxu0 0.0
        %715 = vmatpush1.msra.mxu0 0.0
        %716 = vmatprep.subr.mxu0 0.0
        %717 = vmatpush1.msra.mxu0 0.0
        %718 = vmatprep.subr.mxu0 0.0
        %719 = vmatpush1.msra.mxu0 0.0
        %720 = vmatprep.subr.mxu0 0.0
        %721 = vmatpush1.msra.mxu0 0.0
        %722 = vmatprep.subr.mxu0 0.0
        %723 = vmatpush1.msra.mxu0 0.0
        %724 = vmatprep.subr.mxu0 0.0
        %725 = vmatpush1.msra.mxu0 0.0
        %726 = vmatprep.subr.mxu0 0.0
        %727 = vmatpush1.msra.mxu0 0.0
        %728 = vmatprep.subr.mxu0 0.0
        %729 = vmatpush1.msra.mxu0 0.0
        %730 = vmatprep.subr.mxu0 0.0
        %731 = vmatpush1.msra.mxu0 0.0
        %732 = vmatprep.subr.mxu0 0.0
        %733 = vmatpush1.msra.mxu0 0.0
        %734 = vmatprep.subr.mxu0 0.0
        %735 = vmatpush1.msra.mxu0 0.0
        %736 = vmatprep.subr.mxu0 0.0
        %737 = vmatpush1.msra.mxu0 0.0
        %738 = vmatprep.subr.mxu0 0.0
        %739 = vmatpush1.msra.mxu0 0.0
        %740 = vmatprep.subr.mxu0 0.0
        %741 = vmatpush1.msra.mxu0 0.0
        %742 = vmatprep.subr.mxu0 0.0
        %743 = vmatpush1.msra.mxu0 0.0
        %744 = vmatprep.subr.mxu0 0.0
        %745 = vmatpush1.msra.mxu0 0.0
        %746 = vmatprep.subr.mxu0 0.0
        %747 = vmatpush1.msra.mxu0 0.0
        %748 = vmatprep.subr.mxu0 0.0
        %749 = vmatpush1.msra.mxu0 0.0
        %750 = vmatprep.subr.mxu0 0.0
        %751 = vmatpush1.msra.mxu0 0.0
        %752 = vmatprep.subr.mxu0 0.0
        %753 = vmatpush1.msra.mxu0 0.0
        %754 = vmatprep.subr.mxu0 0.0
        %755 = vmatpush1.msra.mxu0 0.0
        %756 = vmatprep.subr.mxu0 0.0
        %757 = vmatpush1.msra.mxu0 0.0
        %758 = vmatprep.subr.mxu0 0.0
        %759 = vmatpush1.msra.mxu0 0.0
        %760 = vmatprep.subr.mxu0 0.0
        %761 = vmatpush1.msra.mxu0 0.0
        %762 = vmatprep.subr.mxu0 0.0
        %763 = vmatpush1.msra.mxu0 0.0
        %764 = vmatprep.mubr.f32.mxu0 0.0
        %765 = vmatmul.mubr.f32.gmra.mrb[0].mxu0 %v698
        %v766 = vpop.f32.mrb[0].mxu0
        %v767 = vadd.f32 %v695, %v766
        %v768 = vpop.f32.mrb[0].mxu0
        %769 = vdwg.mxu0
        %v770 = vadd.f32 %v496, %v767
        %v771 = vsel %vm497, %v770, 0.0
        %772 = vadd.xlane.f32.xlu0 %v771
        %v773 = vpop.xlane.xlu0 %772
        %v774 = vmul.f32 %v773, %v501
        %v775 = vsub.f32 %v770, %v774
        %v776 = vmul.f32 %v775, %v775
        %v777 = vsel %vm497, %v776, 0.0
        %778 = vadd.xlane.f32.xlu0 %v777
        %v779 = vpop.xlane.xlu0 %778
        %v780 = vmul.f32 %v779, %v501
        %v781 = vadd.f32 %v780, 1e-05
        %v782 = vrsqrt.pop %v781
        %v783 = vmul.f32 %v775, %v782
        %v784 = vld [vmem:[%s8] sm:$0x1]
        %v786 = vlaneseq
        %v787 = vshrl.u32 %v786, 7
        %v788 = vsub.s32 0, %v787
        %v789 = vrot.slane %v784, %v788
        %v791 = vmul.f32 %v783, %v789
        %v792 = vld [vmem:[%s9] sm:$0x1]
        %v794 = vlaneseq
        %v795 = vshrl.u32 %v794, 7
        %v796 = vsub.s32 0, %v795
        %v797 = vrot.slane %v792, %v796
        %v799 = vadd.f32 %v791, %v797
        %v800 = vld [vmem:[%s10] sm:$0xff]
        %v801 = vld [vmem:[%s10 + $0x8] sm:$0xff]
        %v802 = vld [vmem:[%s10 + $0x10] sm:$0xff]
        %v803 = vld [vmem:[%s10 + $0x18] sm:$0xff]
        %v804 = vld [vmem:[%s11] sm:$0x1]
        %v806 = vlaneseq
        %v807 = vshrl.u32 %v806, 7
        %v808 = vsub.s32 0, %v807
        %v809 = vrot.slane %v804, %v808
        %v812 = vsel %vm497, %v799, 0
        %814 = vmatprep.subr.mxu0 0.0
        %815 = vmatpush1.msra.mxu0 %v800
        %816 = vmatprep.subr.mxu0 0.0
        %817 = vmatpush1.msra.mxu0 %v801
        %818 = vmatprep.subr.mxu0 0.0
        %819 = vmatpush1.msra.mxu0 %v802
        %820 = vmatprep.subr.mxu0 0.0
        %821 = vmatpush1.msra.mxu0 %v803
        %822 = vmatprep.subr.mxu0 0.0
        %823 = vmatpush1.msra.mxu0 0.0
        %824 = vmatprep.subr.mxu0 0.0
        %825 = vmatpush1.msra.mxu0 0.0
        %826 = vmatprep.subr.mxu0 0.0
        %827 = vmatpush1.msra.mxu0 0.0
        %828 = vmatprep.subr.mxu0 0.0
        %829 = vmatpush1.msra.mxu0 0.0
        %830 = vmatprep.subr.mxu0 0.0
        %831 = vmatpush1.msra.mxu0 0.0
        %832 = vmatprep.subr.mxu0 0.0
        %833 = vmatpush1.msra.mxu0 0.0
        %834 = vmatprep.subr.mxu0 0.0
        %835 = vmatpush1.msra.mxu0 0.0
        %836 = vmatprep.subr.mxu0 0.0
        %837 = vmatpush1.msra.mxu0 0.0
        %838 = vmatprep.subr.mxu0 0.0
        %839 = vmatpush1.msra.mxu0 0.0
        %840 = vmatprep.subr.mxu0 0.0
        %841 = vmatpush1.msra.mxu0 0.0
        %842 = vmatprep.subr.mxu0 0.0
        %843 = vmatpush1.msra.mxu0 0.0
        %844 = vmatprep.subr.mxu0 0.0
        %845 = vmatpush1.msra.mxu0 0.0
        %846 = vmatprep.subr.mxu0 0.0
        %847 = vmatpush1.msra.mxu0 0.0
        %848 = vmatprep.subr.mxu0 0.0
        %849 = vmatpush1.msra.mxu0 0.0
        %850 = vmatprep.subr.mxu0 0.0
        %851 = vmatpush1.msra.mxu0 0.0
        %852 = vmatprep.subr.mxu0 0.0
        %853 = vmatpush1.msra.mxu0 0.0
        %854 = vmatprep.subr.mxu0 0.0
        %855 = vmatpush1.msra.mxu0 0.0
        %856 = vmatprep.subr.mxu0 0.0
        %857 = vmatpush1.msra.mxu0 0.0
        %858 = vmatprep.subr.mxu0 0.0
        %859 = vmatpush1.msra.mxu0 0.0
        %860 = vmatprep.subr.mxu0 0.0
        %861 = vmatpush1.msra.mxu0 0.0
        %862 = vmatprep.subr.mxu0 0.0
        %863 = vmatpush1.msra.mxu0 0.0
        %864 = vmatprep.subr.mxu0 0.0
        %865 = vmatpush1.msra.mxu0 0.0
        %866 = vmatprep.subr.mxu0 0.0
        %867 = vmatpush1.msra.mxu0 0.0
        %868 = vmatprep.subr.mxu0 0.0
        %869 = vmatpush1.msra.mxu0 0.0
        %870 = vmatprep.subr.mxu0 0.0
        %871 = vmatpush1.msra.mxu0 0.0
        %872 = vmatprep.subr.mxu0 0.0
        %873 = vmatpush1.msra.mxu0 0.0
        %874 = vmatprep.subr.mxu0 0.0
        %875 = vmatpush1.msra.mxu0 0.0
        %876 = vmatprep.subr.mxu0 0.0
        %877 = vmatpush1.msra.mxu0 0.0
        %878 = vmatprep.mubr.f32.mxu0 0.0
        %879 = vmatmul.mubr.f32.gmra.mrb[0].mxu0 %v812
        %v880 = vpop.f32.mrb[0].mxu0
        %v881 = vadd.f32 %v809, %v880
        %v882 = vpop.f32.mrb[0].mxu0
        %883 = vdwg.mxu0
        %v884 = vmul.f32 %v881, 0.5
        %v885 = vmul.f32 %v881, 0.70710677
        %v886 = verf.f32.pop %v885
        %v887 = vadd.f32 %v886, 1.0
        %v888 = vmul.f32 %v884, %v887
        %v889 = vld [vmem:[%s12] sm:$0xff]
        %v890 = vld [vmem:[%s12 + $0x8] sm:$0xff]
        %v891 = vld [vmem:[%s12 + $0x10] sm:$0xff]
        %v892 = vld [vmem:[%s12 + $0x18] sm:$0xff]
        %v893 = vld [vmem:[%s12 + $0x20] sm:$0xff]
        %v894 = vld [vmem:[%s12 + $0x28] sm:$0xff]
        %v895 = vld [vmem:[%s12 + $0x30] sm:$0xff]
        %v896 = vld [vmem:[%s12 + $0x38] sm:$0xff]
        %v897 = vld [vmem:[%s13] sm:$0x1]
        %v899 = vlaneseq
        %v900 = vshrl.u32 %v899, 7
        %v901 = vsub.s32 0, %v900
        %v902 = vrot.slane %v897, %v901
        %vm904 = vcmask 523264
        %v906 = vsel %vm904, %v888, 0
        %908 = vmatprep.subr.mxu0 0.0
        %909 = vmatpush1.msra.mxu0 %v889
        %910 = vmatprep.subr.mxu0 0.0
        %911 = vmatpush1.msra.mxu0 %v890
        %912 = vmatprep.subr.mxu0 0.0
        %913 = vmatpush1.msra.mxu0 %v891
        %914 = vmatprep.subr.mxu0 0.0
        %915 = vmatpush1.msra.mxu0 %v892
        %916 = vmatprep.subr.mxu0 0.0
        %917 = vmatpush1.msra.mxu0 %v893
        %918 = vmatprep.subr.mxu0 0.0
        %919 = vmatpush1.msra.mxu0 %v894
        %920 = vmatprep.subr.mxu0 0.0
        %921 = vmatpush1.msra.mxu0 %v895
        %922 = vmatprep.subr.mxu0 0.0
        %923 = vmatpush1.msra.mxu0 %v896
        %924 = vmatprep.subr.mxu0 0.0
        %925 = vmatpush1.msra.mxu0 0.0
        %926 = vmatprep.subr.mxu0 0.0
        %927 = vmatpush1.msra.mxu0 0.0
        %928 = vmatprep.subr.mxu0 0.0
        %929 = vmatpush1.msra.mxu0 0.0
        %930 = vmatprep.subr.mxu0 0.0
        %931 = vmatpush1.msra.mxu0 0.0
        %932 = vmatprep.subr.mxu0 0.0
        %933 = vmatpush1.msra.mxu0 0.0
        %934 = vmatprep.subr.mxu0 0.0
        %935 = vmatpush1.msra.mxu0 0.0
        %936 = vmatprep.subr.mxu0 0.0
        %937 = vmatpush1.msra.mxu0 0.0
        %938 = vmatprep.subr.mxu0 0.0
        %939 = vmatpush1.msra.mxu0 0.0
        %940 = vmatprep.subr.mxu0 0.0
        %941 = vmatpush1.msra.mxu0 0.0
        %942 = vmatprep.subr.mxu0 0.0
        %943 = vmatpush1.msra.mxu0 0.0
        %944 = vmatprep.subr.mxu0 0.0
        %945 = vmatpush1.msra.mxu0 0.0
        %946 = vmatprep.subr.mxu0 0.0
        %947 = vmatpush1.msra.mxu0 0.0
        %948 = vmatprep.subr.mxu0 0.0
        %949 = vmatpush1.msra.mxu0 0.0
        %950 = vmatprep.subr.mxu0 0.0
        %951 = vmatpush1.msra.mxu0 0.0
        %952 = vmatprep.subr.mxu0 0.0
        %953 = vmatpush1.msra.mxu0 0.0
        %954 = vmatprep.subr.mxu0 0.0
        %955 = vmatpush1.msra.mxu0 0.0
        %956 = vmatprep.subr.mxu0 0.0
        %957 = vmatpush1.msra.mxu0 0.0
        %958 = vmatprep.subr.mxu0 0.0
        %959 = vmatpush1.msra.mxu0 0.0
        %960 = vmatprep.subr.mxu0 0.0
        %961 = vmatpush1.msra.mxu0 0.0
        %962 = vmatprep.subr.mxu0 0.0
        %963 = vmatpush1.msra.mxu0 0.0
        %964 = vmatprep.subr.mxu0 0.0
        %965 = vmatpush1.msra.mxu0 0.0
        %966 = vmatprep.subr.mxu0 0.0
        %967 = vmatpush1.msra.mxu0 0.0
        %968 = vmatprep.subr.mxu0 0.0
        %969 = vmatpush1.msra.mxu0 0.0
        %970 = vmatprep.subr.mxu0 0.0
        %971 = vmatpush1.msra.mxu0 0.0
        %972 = vmatprep.mubr.f32.mxu0 0.0
        %973 = vmatmul.mubr.f32.gmra.mrb[0].mxu0 %v906
        %v974 = vpop.f32.mrb[0].mxu0
        %v975 = vadd.f32 %v902, %v974
        %v976 = vpop.f32.mrb[0].mxu0
        %977 = vdwg.mxu0
        %v978 = vadd.f32 %v770, %v975
        %979 = vst.msk [vmem:[%s495] sm:$0xff] %vm497, %v978
        %s980 = sand.u32 %s339, 1
        %s981 = scalar_lea.sflag [#allocation4], %s980
        %s982 = sand.u32 %s339, 1
        %s983 = smul.addr %s982, 8
        %s984 = scalar_lea.vmem [#allocation7], %s983
        // Predicated region
        $region85: #{tpu_custom_call.1} parent=75 // pred_check
          %p985 = pneg %p349
        $region86: #{tpu_custom_call.1} parent=75 // pred_check_branch
          %987 = sbr.rel (%p985) target = $region88
        $region87: #{tpu_custom_call.1} parent=75 // pred_region
          %s989 = ssub.s32 128, 128
          %990 = vsyncadd %s981, %s989
          %s991 = smul.addr %s32, 128
          %s992 = scalar_lea.hbm %s14, %s991
          %s994 = sshll.u32 %s984, 4
          %s995 = int_to_ptr.vmem [resolvable:$true] %s994
          %997 = dma.vmem_to_hbm [thread:$0]  %s995, 128, %s992, %s981
        $region88: #{tpu_custom_call.1} parent=75 // pred_fallthru
          _
      $region76: #{tpu_custom_call.1} parent=5 // pred_fallthru
        _
      %p998 = scmp.le.s32.totalorder 2, %s27
      // Predicated region
      $region89: #{tpu_custom_call.1} parent=5 // pred_check
        %p999 = pneg %p998
      $region90: #{tpu_custom_call.1} parent=5 // pred_check_branch
        %1001 = sbr.rel (%p999) target = $region92
      $region91: #{tpu_custom_call.1} parent=5 // pred_region
        %s1002 = ssub.s32 %s27, 2
        // Predicated region
        $region93: #{tpu_custom_call.1} parent=91 // pred_check
          %p1003 = pneg %p355
        $region94: #{tpu_custom_call.1} parent=91 // pred_check_branch
          %1005 = sbr.rel (%p1003) target = $region96
        $region95: #{tpu_custom_call.1} parent=91 // pred_region
          %s1006 = sand.u32 %s340, 1
          %s1007 = scalar_lea.sflag [#allocation4], %s1006
          %s1008 = sand.u32 %s340, 1
          %s1009 = smul.addr %s1008, 8
          %s1010 = scalar_lea.vmem [#allocation7], %s1009
          %1011 = dma.done %s1007, 128
        $region96: #{tpu_custom_call.1} parent=91 // pred_fallthru
          _
      $region92: #{tpu_custom_call.1} parent=5 // pred_fallthru
        _
    $region6: #{tpu_custom_call.1} parent=1 // loop_footer
      %s31 = sadd.s32 1, %s27
    $region7: #{tpu_custom_call.1} parent=1 // loop_footer_branch
      %26 = sbr.rel target = $region3
    $region8: #{tpu_custom_call.1} parent=1 // loop_exit
      _
    %1012 = vsyncpa [#allocation3], 1
    %s1013 = scalar_lea.sflag [#allocation3], 1
    %1014 = vsyncpa %s1013, 1
    %1015 = vsyncpa [#allocation6], 1
    %1016 = vsyncpa [#allocation4], 1
    %s1017 = scalar_lea.sflag [#allocation4], 1
    %1018 = vsyncpa %s1017, 1

</llo_original>
